<compile_context>
chip_gen: v7x
topology: tpu7x:2x2x1
jax: 0.10.0
libtpu: 0.0.40
codegen_flags: <defaults>
</compile_context>

<pallas_src>
import jax
import jax.numpy as jnp
from jax.experimental import pallas as pl
from jax.experimental.pallas import tpu as pltpu

LANE = 128
ROW_PAD = 128   # node-dim pad: clean MXU tiles, fully packed bf16 sublanes


def _round_up(v, m):
    return (v + m - 1) // m * m


# -------------------- fused Pallas kernel --------------------

def _fused_gcn_kernel(x_hbm, adj_hbm, w_ref, b_ref, out_ref,
                      act_ref, adj_ref, dinv_ref):
    """One grid step == one DenseGCNConv layer (add_loop=False) + bias + ReLU.

    act_ref (bf16), adj_ref (bf16, resident copy of A) and dinv_ref (f32) live
    in VMEM scratch across grid iterations.  Only W_l / b_l / out_l are
    pipelined per layer.
        out = s * (A @ (s * (h @ W))) + b  ==  D^{-1/2} A D^{-1/2} (h W) + b
    """
    layer = pl.program_id(0)

    @pl.when(layer == 0)
    def _init():
        # One-time DMA of the constant operands (single-buffered, never refilled).
        pltpu.sync_copy(x_hbm, act_ref)
        pltpu.sync_copy(adj_hbm, adj_ref)
        # degree in f32 (adj stored as bf16; cast before reducing)
        deg = jnp.sum(adj_ref[...].astype(jnp.float32), axis=-1, keepdims=True)
        dinv_ref[...] = jax.lax.rsqrt(jnp.maximum(deg, 1.0))    # clamp(min=1)^-0.5

    s = dinv_ref[...]                                            # (Np, 1)  f32

    # bf16 MXU operands straight from VMEM (no per-layer casts), f32 accumulation.
    hw = jnp.dot(act_ref[...], w_ref[0],
                 preferred_element_type=jnp.float32)             # h @ W
    t = jnp.dot(adj_ref[...], (s * hw).astype(jnp.bfloat16),
                preferred_element_type=jnp.float32)              # A @ (s * hW)
    out = jnp.maximum(s * t + b_ref[0], 0.0)                     # bias + ReLU (f32)
    # feature Dropout(0.1) is identity in eval mode.

    act_ref[...] = out.astype(jnp.bfloat16)   # carried to next layer (VMEM-resident)
    out_ref[0] = out                           # per-layer embedding (lane-dense, padded)


# -------------------- wrapper --------------------

def dense_gcn_model_forward(x, adj, params):
    """Fused DenseGCNModel forward (inference). Returns per-layer embeddings (f32)."""
    N, Fin = x.shape
    L = len(params)
    dims = [Fin] + [w.shape[1] for (w, _) in params]

    Np = _round_up(N, ROW_PAD)
    Fp = _round_up(max(dims), LANE)   # shared lane-dense feature width
    # NOTE: uniform (Fp, Fp) weight padding is fine for similar layer widths;
    # strongly heterogeneous dims would want per-layer padding / separate calls.

    # bf16 HBM storage for the matmul operands (half the DMA / VMEM of f32).
    x_p = jnp.zeros((Np, Fp), jnp.bfloat16).at[:N, :Fin].set(x.astype(jnp.bfloat16))
    adj_p = jnp.zeros((Np, Np), jnp.bfloat16).at[:N, :N].set(adj.astype(jnp.bfloat16))
    w_p = jnp.zeros((L, Fp, Fp), jnp.bfloat16)
    b_p = jnp.zeros((L, 1, Fp), jnp.float32)
    for l, (w, b) in enumerate(params):
        w_p = w_p.at[l, :w.shape[0], :w.shape[1]].set(w.astype(jnp.bfloat16))
        b_p = b_p.at[l, 0, :b.shape[0]].set(b)

    # VMEM footprint: single-buffered adj/act/dinv scratch + double-buffered W/b/out.
    vmem_bytes = (Np * Np * 2            # adj scratch (bf16)
                  + Np * Fp * 2          # activation carry (bf16)
                  + Np * LANE * 4        # dinv (lane-padded f32)
                  + 2 * Fp * Fp * 2      # W_l double-buffered (bf16)
                  + 2 * 8 * Fp * 4       # b_l double-buffered (f32, sublane-padded)
                  + 2 * Np * Fp * 4)     # out_l double-buffered (f32)
    vmem_limit = int(min(max(1.5 * vmem_bytes + (4 << 20), 32 << 20), 128 << 20))

    out = pl.pallas_call(
        _fused_gcn_kernel,
        out_shape=jax.ShapeDtypeStruct((L, Np, Fp), jnp.float32),
        grid_spec=pltpu.PrefetchScalarGridSpec(
            num_scalar_prefetch=0,
            grid=(L,),
            in_specs=[
                pl.BlockSpec(memory_space=pl.ANY),               # x   (DMA'd once, layer 0)
                pl.BlockSpec(memory_space=pl.ANY),               # adj (DMA'd once, layer 0)
                pl.BlockSpec((1, Fp, Fp), lambda l: (l, 0, 0)),  # W_l (streamed)
                pl.BlockSpec((1, 1, Fp), lambda l: (l, 0, 0)),   # b_l (streamed)
            ],
            out_specs=pl.BlockSpec((1, Np, Fp), lambda l: (l, 0, 0)),
            scratch_shapes=[
                pltpu.VMEM((Np, Fp), jnp.bfloat16),   # activation carry
                pltpu.VMEM((Np, Np), jnp.bfloat16),   # adjacency, resident
                pltpu.VMEM((Np, 1), jnp.float32),     # dinv
            ],
        ),
        compiler_params=pltpu.CompilerParams(
            dimension_semantics=("arbitrary",),      # layers are sequential (act carry)
            vmem_limit_bytes=vmem_limit,
        ),
    )(x_p, adj_p, w_p, b_p)

    # strip node/feature padding; torch.squeeze(dim=0) equivalent: already 2D
    return [out[l, :N, :dims[l + 1]] for l in range(L)]


# -------------------- parameter init (deterministic) --------------------

def _glorot(key, shape):
    fan_in, fan_out = shape
    limit = jnp.sqrt(6.0 / (fan_in + fan_out))
    return jax.random.uniform(key, shape, jnp.float32, -limit, limit)


def init_params(key, layers_dim):
    """Per DenseGCNConv: glorot weight (Fin, Fout), zero bias (Fout,)."""
    params = []
    for i in range(len(layers_dim) - 1):
        key, sub = jax.random.split(key)
        w = _glorot(sub, (layers_dim[i], layers_dim[i + 1]))
        b = jnp.zeros((layers_dim[i + 1],), jnp.float32)
        params.append((w, b))
    return params


if __name__ == "__main__":
    key = jax.random.PRNGKey(0)
    num_drug, num_target = 8, 8
    N = num_drug + num_target            # 16 nodes
    layers_dim = [16, 32, 16]            # 2 GCN layers

    kx, ka, kp = jax.random.split(key, 3)
    x = jax.random.normal(kx, (N, layers_dim[0]), jnp.float32)

    # random symmetric adjacency with zero diagonal (add_loop=False in the model)
    a = jax.random.uniform(ka, (N, N), jnp.float32)
    adj = (a > 0.7).astype(jnp.float32)
    adj = jnp.maximum(adj, adj.T) * (1.0 - jnp.eye(N, dtype=jnp.float32))

    params = init_params(kp, layers_dim)

    embeddings = dense_gcn_model_forward(x, adj, params)
    for e in embeddings:
        jax.block_until_ready(e)

    assert embeddings[0].shape == (N, layers_dim[1])
    assert embeddings[1].shape == (N, layers_dim[2])

    # pure-JAX f32 reference (DenseGCNConv add_loop=False + bias + ReLU)
    deg = jnp.maximum(adj.sum(-1, keepdims=True), 1.0)
    dinv = deg ** -0.5
    adj_n = dinv * adj * dinv.T
    ref = x
    for l, (w, b) in enumerate(params):
        ref = jnp.maximum(adj_n @ (ref @ w) + b, 0.0)
        err = float(jnp.max(jnp.abs(ref - embeddings[l])))
        assert err < 0.1, f"layer {l}: max abs err {err} (bf16 matmul tolerance)"

    print("KERNEL_OK")
</pallas_src>

<mosaic_0001>
module attributes {stable_mosaic.version = 11 : i64} {
  func.func @_fused_gcn_kernel(%arg0: i32, %arg1: memref<128x128xbf16, #tpu.memory_space<any>>, %arg2: memref<128x128xbf16, #tpu.memory_space<any>>, %arg3: memref<1x128x128xbf16, #tpu.memory_space<vmem>>, %arg4: memref<1x1x128xf32, #tpu.memory_space<vmem>>, %arg5: memref<1x128x128xf32, #tpu.memory_space<vmem>>, %arg6: memref<128x128xbf16, #tpu.memory_space<vmem>>, %arg7: memref<128x128xbf16, #tpu.memory_space<vmem>>, %arg8: memref<128x1xf32, #tpu.memory_space<vmem>>) attributes {dimension_semantics = [#tpu.dimension_semantics<arbitrary>], iteration_bounds = array<i64: 2>, scalar_prefetch = 0 : i64, scratch_operands = 3 : i64, tpu.core_type = #tpu.core_type<tc>, window_params = [{}, {}, {transform_indices = @transform_2, window_bounds = array<i64: 1, 128, 128>}, {transform_indices = @transform_3, window_bounds = array<i64: 1, 1, 128>}, {transform_indices = @transform_4, window_bounds = array<i64: 1, 128, 128>}]} {
    %c0_i32 = arith.constant 0 : i32
    %0 = arith.cmpi eq, %arg0, %c0_i32 : i32
    %1 = arith.extui %0 : i1 to i32
    %c0_i32_0 = arith.constant 0 : i32
    %2 = arith.cmpi ne, %1, %c0_i32_0 : i32
    scf.if %2 {
      "tpu.region"() ({
        %34 = tpu.sem_alloc : memref<!tpu.dma_semaphore, #tpu.memory_space<semaphore_mem>>
        tpu.enqueue_dma source(%arg1 : memref<128x128xbf16, #tpu.memory_space<any>>) target(%arg6 : memref<128x128xbf16, #tpu.memory_space<vmem>>) target_semaphore(%34 : memref<!tpu.dma_semaphore, #tpu.memory_space<semaphore_mem>>)
        tpu.wait_dma2 semaphore(%34 : memref<!tpu.dma_semaphore, #tpu.memory_space<semaphore_mem>>) src(%arg1 : memref<128x128xbf16, #tpu.memory_space<any>>) dst(%arg6 : memref<128x128xbf16, #tpu.memory_space<vmem>>)
        tpu.yield
      }) : () -> ()
      "tpu.region"() ({
        %34 = tpu.sem_alloc : memref<!tpu.dma_semaphore, #tpu.memory_space<semaphore_mem>>
        tpu.enqueue_dma source(%arg2 : memref<128x128xbf16, #tpu.memory_space<any>>) target(%arg7 : memref<128x128xbf16, #tpu.memory_space<vmem>>) target_semaphore(%34 : memref<!tpu.dma_semaphore, #tpu.memory_space<semaphore_mem>>)
        tpu.wait_dma2 semaphore(%34 : memref<!tpu.dma_semaphore, #tpu.memory_space<semaphore_mem>>) src(%arg2 : memref<128x128xbf16, #tpu.memory_space<any>>) dst(%arg7 : memref<128x128xbf16, #tpu.memory_space<vmem>>)
        tpu.yield
      }) : () -> ()
      %c0_19 = arith.constant 0 : index
      %c0_20 = arith.constant 0 : index
      %26 = vector.load %arg7[%c0_19, %c0_20] : memref<128x128xbf16, #tpu.memory_space<vmem>>, vector<128x128xbf16>
      %27 = arith.extf %26 : vector<128x128xbf16> to vector<128x128xf32>
      %cst_21 = arith.constant dense<0.000000e+00> : vector<128xf32>
      %28 = vector.multi_reduction <add>, %27, %cst_21 [1] : vector<128x128xf32> to vector<128xf32>
      %29 = vector.shape_cast %28 : vector<128xf32> to vector<128x1xf32>
      %cst_22 = arith.constant 1.000000e+00 : f32
      %30 = vector.broadcast %cst_22 : f32 to vector<128x1xf32>
      %31 = arith.maximumf %29, %30 : vector<128x1xf32>
      %32 = math.rsqrt %31 : vector<128x1xf32>
      %c0_23 = arith.constant 0 : index
      %c0_24 = arith.constant 0 : index
      %33 = vector.load %arg8[%c0_23, %c0_24] : memref<128x1xf32, #tpu.memory_space<vmem>>, vector<128x1xf32>
      tpu.vector_store %arg8[%c0_23, %c0_24], %32 {strides = array<i32>} : memref<128x1xf32, #tpu.memory_space<vmem>>, vector<128x1xf32>,
    } else {
    }
    %c0 = arith.constant 0 : index
    %c0_1 = arith.constant 0 : index
    %3 = vector.load %arg8[%c0, %c0_1] : memref<128x1xf32, #tpu.memory_space<vmem>>, vector<128x1xf32>
    %c0_2 = arith.constant 0 : index
    %c0_3 = arith.constant 0 : index
    %4 = vector.load %arg6[%c0_2, %c0_3] : memref<128x128xbf16, #tpu.memory_space<vmem>>, vector<128x128xbf16>
    %c0_4 = arith.constant 0 : index
    %c0_5 = arith.constant 0 : index
    %c0_6 = arith.constant 0 : index
    %5 = vector.load %arg3[%c0_4, %c0_5, %c0_6] : memref<1x128x128xbf16, #tpu.memory_space<vmem>>, vector<1x128x128xbf16>
    %6 = vector.shape_cast %5 : vector<1x128x128xbf16> to vector<128x128xbf16>
    %cst = arith.constant dense<0.000000e+00> : vector<128x128xf32>
    %7 = tpu.matmul %4, %6, %cst {dimension_numbers = #tpu.dot_dimension_numbers<[1], [0], [0], [1], [0, 0, 1, 1], [], []>} : vector<128x128xbf16>, vector<128x128xbf16>, vector<128x128xf32> -> vector<128x128xf32>
    %c0_7 = arith.constant 0 : index
    %c0_8 = arith.constant 0 : index
    %8 = vector.load %arg7[%c0_7, %c0_8] : memref<128x128xbf16, #tpu.memory_space<vmem>>, vector<128x128xbf16>
    %9 = vector.broadcast %3 : vector<128x1xf32> to vector<128x128xf32>
    %10 = arith.mulf %9, %7 : vector<128x128xf32>
    %11 = arith.truncf %10 : vector<128x128xf32> to vector<128x128xbf16>
    %cst_9 = arith.constant dense<0.000000e+00> : vector<128x128xf32>
    %12 = tpu.matmul %8, %11, %cst_9 {dimension_numbers = #tpu.dot_dimension_numbers<[1], [0], [0], [1], [0, 0, 1, 1], [], []>} : vector<128x128xbf16>, vector<128x128xbf16>, vector<128x128xf32> -> vector<128x128xf32>
    %13 = vector.broadcast %3 : vector<128x1xf32> to vector<128x128xf32>
    %14 = arith.mulf %13, %12 : vector<128x128xf32>
    %c0_10 = arith.constant 0 : index
    %c0_11 = arith.constant 0 : index
    %c0_12 = arith.constant 0 : index
    %15 = vector.load %arg4[%c0_10, %c0_11, %c0_12] : memref<1x1x128xf32, #tpu.memory_space<vmem>>, vector<1x1x128xf32>
    %16 = vector.shape_cast %15 : vector<1x1x128xf32> to vector<1x128xf32>
    %17 = vector.broadcast %16 : vector<1x128xf32> to vector<128x128xf32>
    %18 = arith.addf %14, %17 : vector<128x128xf32>
    %cst_13 = arith.constant 0.000000e+00 : f32
    %19 = vector.broadcast %cst_13 : f32 to vector<128x128xf32>
    %20 = arith.maximumf %18, %19 : vector<128x128xf32>
    %21 = arith.truncf %20 : vector<128x128xf32> to vector<128x128xbf16>
    %c0_14 = arith.constant 0 : index
    %c0_15 = arith.constant 0 : index
    %22 = vector.load %arg6[%c0_14, %c0_15] : memref<128x128xbf16, #tpu.memory_space<vmem>>, vector<128x128xbf16>
    tpu.vector_store %arg6[%c0_14, %c0_15], %21 {strides = array<i32>} : memref<128x128xbf16, #tpu.memory_space<vmem>>, vector<128x128xbf16>,
    %c0_16 = arith.constant 0 : index
    %c0_17 = arith.constant 0 : index
    %c0_18 = arith.constant 0 : index
    %23 = vector.load %arg5[%c0_16, %c0_17, %c0_18] : memref<1x128x128xf32, #tpu.memory_space<vmem>>, vector<1x128x128xf32>
    %24 = vector.shape_cast %23 : vector<1x128x128xf32> to vector<128x128xf32>
    %25 = vector.shape_cast %20 : vector<128x128xf32> to vector<1x128x128xf32>
    tpu.vector_store %arg5[%c0_16, %c0_17, %c0_18], %25 {strides = array<i32>} : memref<1x128x128xf32, #tpu.memory_space<vmem>>, vector<1x128x128xf32>,
    return
  }
  func.func @transform_2(%arg0: i32) -> (i32, i32, i32) {
    %c0_i32 = arith.constant 0 : i32
    %c0_i32_0 = arith.constant 0 : i32
    %c0_i32_1 = arith.constant 0 : i32
    return %arg0, %c0_i32, %c0_i32_0 : i32, i32, i32
  }
  func.func @transform_3(%arg0: i32) -> (i32, i32, i32) {
    %c0_i32 = arith.constant 0 : i32
    %c0_i32_0 = arith.constant 0 : i32
    %c0_i32_1 = arith.constant 0 : i32
    return %arg0, %c0_i32, %c0_i32_0 : i32, i32, i32
  }
  func.func @transform_4(%arg0: i32) -> (i32, i32, i32) {
    %c0_i32 = arith.constant 0 : i32
    %c0_i32_0 = arith.constant 0 : i32
    %c0_i32_1 = arith.constant 0 : i32
    return %arg0, %c0_i32, %c0_i32_0 : i32, i32, i32
  }
}

</mosaic_0001>

<llo_original>
// kernel: tpu_custom_call.1
$region0: #{tpu_custom_call.1}
  #allocation0 [shape = 'u32[]', space=smem, size = 0x4, offset = 0x4, fixed_abs, tag = 'smem constant byte address 0x4 - core index']
  #allocation1 [shape = 'u32[144,128]{1,0:T(1,128)}', space=vmem, size = 0x12000, scoped, tag = 'internal scratch']
  #allocation2 [shape = 'bf16[128,128]{1,0:T(16,128)(2,1)}', space=vmem, size = 0x8000, scoped, tag = 'scratch operand']
  #allocation3 [shape = 'bf16[128,128]{1,0:T(16,128)(2,1)}', space=vmem, size = 0x8000, scoped, tag = 'scratch operand']
  #allocation4 [shape = 'f32[128,1]{1,0:T(8,128)}', space=vmem, size = 0x10000, scoped, tag = 'scratch operand']
  #allocation10 [shape = 's32[]', space=sflag, size = 0x4, offset = 0, fixed_abs, tag = 'sflag constant byte address 0x0 - dummy sync flag']
  #allocation11 [shape = 's32[]', space=sflag, size = 0x4, offset = 0, fixed_abs, tag = 'sflag constant byte address 0x0 - dummy sync flag']
  #allocation12 [shape = 'u32[]', space=smem, size = 0x4, offset = 0x44, fixed_abs, tag = 'smem constant byte address 0x44 - assertion arg 0']
  #allocation13 [shape = 'u32[]', space=smem, size = 0x4, offset = 0x48, fixed_abs, tag = 'smem constant byte address 0x48 - assertion arg 1']
  #allocation15 [shape = 's32[]', space=sflag, size = 0x4, offset = 0, fixed_abs, tag = 'sflag constant byte address 0x0 - dummy sync flag']
  #allocation16 [shape = 's32[]', space=sflag, size = 0x4, offset = 0, fixed_abs, tag = 'sflag constant byte address 0x0 - dummy sync flag']
  %s0 = inlined_call_operand.hbm [shape: bf16[128,128], index: 0, kind: input, shape index: {}]
  %s1 = inlined_call_operand.hbm [shape: bf16[128,128], index: 1, kind: input, shape index: {}]
  %s2 = inlined_call_operand.hbm [shape: bf16[2,128,128], index: 2, kind: input, shape index: {}]
  %s3 = inlined_call_operand.vmem [shape: f32[2,1,128], index: 3, kind: input, shape index: {}]
  %s4 = inlined_call_operand.hbm [shape: f32[2,128,128], index: 4, kind: output, shape index: {}]
  %s5 = sld [smem:[#allocation0]]
  $region59: #{tpu_custom_call.1} parent=0
    _
  %s7 = ssub.s32 1, %s5
  %s8 = scalar_select 0, %s7, %s5
  $region1: #{tpu_custom_call.1} parent=0
    #allocation5 [shape = 'u8[65536]{0}', space=vmem, size = 0x10000, scoped, tag = 'input window, operand 2']
    #allocation6 [shape = 's32[2]{0}', space=sflag, size = 0x8, scoped, tag = 'scoped memory for tpu_custom_call.1']
    #allocation7 [shape = 's32[2]{0}', space=sflag, size = 0x8, scoped, tag = 'scoped memory for tpu_custom_call.1']
    #allocation8 [shape = 'u8[131072]{0}', space=vmem, size = 0x20000, scoped, tag = 'output window, operand 0']
    %9 = vsyncpa [#allocation6], 0
    %s10 = scalar_lea.sflag [#allocation6], 1
    %11 = vsyncpa %s10, 0
    %12 = vsyncpa [#allocation7], 0
    %s13 = scalar_lea.sflag [#allocation7], 1
    %14 = vsyncpa %s13, 0
    loop: start=0, step=1, limit=4
    $region2: #{tpu_custom_call.1} parent=1 // loop_pre_header
      _
    $region3: #{tpu_custom_call.1} parent=1 // loop_header
      %s16 = sphi 0, %s20
      %p17 = scmp.ge.s32.totalorder %s16, 4
      %s26 = sphi 0, %s28
      %s29 = sphi 0, %s26
      %s30 = sphi 0, %s29
      %s46 = sphi 0, %s30
      %s52 = sphi 0, %s54
      %s55 = sphi 0, %s52
      %s56 = sphi 0, %s55
      %s72 = sphi 0, %s56
      %s78 = sphi 0, %s80
      %s81 = sphi 0, %s78
      %s82 = sphi 0, %s81
      %s98 = sphi 0, %s82
    $region4: #{tpu_custom_call.1} parent=1 // loop_header_branch
      %19 = sbr.rel (%p17) target = $region8
    $region5: #{tpu_custom_call.1} parent=1 // loop_body
      %s21 = ssub.s32 %s16, 1
      %s22 = ssub.s32 %s16, 2
      %s23 = sadd.s32 %s16, 1
      %s24 = ssub.s32 %s16, %s23
      %p25 = scmp.eq.s32.totalorder %s24, 0
      %s27 = sadd.s32 %s26, 1
      %s28 = scalar_select %p25, %s26, %s27
      %p31 = pneg %p25
      %p32 = scmp.eq.s32.totalorder %s16, 1
      %p33 = por %p31, %p32
      %p34 = scmp.ne.s32.totalorder %s26, %s29
      %p35 = scmp.eq.s32.totalorder %s16, 0
      %p36 = por %p34, %p35
      %p37 = scmp.ne.s32.totalorder %s26, %s29
      %p38 = scmp.eq.s32.totalorder %s21, 1
      %p39 = por %p37, %p38
      %p40 = scmp.ne.s32.totalorder %s29, %s30
      %p41 = scmp.eq.s32.totalorder %s21, 0
      %p42 = por %p40, %p41
      %p43 = scmp.ne.s32.totalorder %s29, %s30
      %p44 = scmp.eq.s32.totalorder %s22, 1
      %p45 = por %p43, %p44
      %p47 = scmp.ne.s32.totalorder %s30, %s46
      %p48 = scmp.eq.s32.totalorder %s22, 0
      %p49 = por %p47, %p48
      %s50 = ssub.s32 %s16, %s23
      %p51 = scmp.eq.s32.totalorder %s50, 0
      %s53 = sadd.s32 %s52, 1
      %s54 = scalar_select %p51, %s52, %s53
      %p57 = pneg %p51
      %p58 = scmp.eq.s32.totalorder %s16, 1
      %p59 = por %p57, %p58
      %p60 = scmp.ne.s32.totalorder %s52, %s55
      %p61 = scmp.eq.s32.totalorder %s16, 0
      %p62 = por %p60, %p61
      %p63 = scmp.ne.s32.totalorder %s52, %s55
      %p64 = scmp.eq.s32.totalorder %s21, 1
      %p65 = por %p63, %p64
      %p66 = scmp.ne.s32.totalorder %s55, %s56
      %p67 = scmp.eq.s32.totalorder %s21, 0
      %p68 = por %p66, %p67
      %p69 = scmp.ne.s32.totalorder %s55, %s56
      %p70 = scmp.eq.s32.totalorder %s22, 1
      %p71 = por %p69, %p70
      %p73 = scmp.ne.s32.totalorder %s56, %s72
      %p74 = scmp.eq.s32.totalorder %s22, 0
      %p75 = por %p73, %p74
      %s76 = ssub.s32 %s16, %s23
      %p77 = scmp.eq.s32.totalorder %s76, 0
      %s79 = sadd.s32 %s78, 1
      %s80 = scalar_select %p77, %s78, %s79
      %p83 = pneg %p77
      %p84 = scmp.eq.s32.totalorder %s16, 1
      %p85 = por %p83, %p84
      %p86 = scmp.ne.s32.totalorder %s78, %s81
      %p87 = scmp.eq.s32.totalorder %s16, 0
      %p88 = por %p86, %p87
      %p89 = scmp.ne.s32.totalorder %s78, %s81
      %p90 = scmp.eq.s32.totalorder %s21, 1
      %p91 = por %p89, %p90
      %p92 = scmp.ne.s32.totalorder %s81, %s82
      %p93 = scmp.eq.s32.totalorder %s21, 0
      %p94 = por %p92, %p93
      %p95 = scmp.ne.s32.totalorder %s81, %s82
      %p96 = scmp.eq.s32.totalorder %s22, 1
      %p97 = por %p95, %p96
      %p99 = scmp.ne.s32.totalorder %s82, %s98
      %p100 = scmp.eq.s32.totalorder %s22, 0
      %p101 = por %p99, %p100
      %p102 = scmp.le.s32.totalorder 1, %s16
      %p103 = scmp.lt.s32.totalorder %s16, 3
      %p104 = pnand %p102, %p103
      %p105 = pneg %p104
      // Predicated region
      $region9: #{tpu_custom_call.1} parent=5 // pred_check
        _
      $region10: #{tpu_custom_call.1} parent=5 // pred_check_branch
        %107 = sbr.rel (%p104) target = $region12
      $region11: #{tpu_custom_call.1} parent=5 // pred_region
        %s108 = ssub.s32 %s16, 1
      $region12: #{tpu_custom_call.1} parent=5 // pred_fallthru
        _
      %p109 = scmp.lt.s32.totalorder %s16, 2
      // Predicated region
      $region13: #{tpu_custom_call.1} parent=5 // pred_check
        %p110 = pneg %p109
      $region14: #{tpu_custom_call.1} parent=5 // pred_check_branch
        %112 = sbr.rel (%p110) target = $region16
      $region15: #{tpu_custom_call.1} parent=5 // pred_region
        // Predicated region
        $region17: #{tpu_custom_call.1} parent=15 // pred_check
          %p113 = pneg %p36
        $region18: #{tpu_custom_call.1} parent=15 // pred_check_branch
          %115 = sbr.rel (%p113) target = $region20
        $region19: #{tpu_custom_call.1} parent=15 // pred_region
          %s116 = sand.u32 %s26, 1
          %s117 = scalar_lea.sflag [#allocation6], %s116
          %s118 = sand.u32 %s26, 1
          %s119 = smul.addr %s118, 64
          %s120 = scalar_lea.vmem [#allocation5], %s119
          %s122 = ssub.s32 1024, 1024
          %123 = vsyncadd %s117, %s122
          %s124 = smul.addr %s16, 16
          %s125 = smul.addr %s124, 64
          %s126 = scalar_lea.hbm %s2, %s125
          %s127 = sshll.u32 %s120, 4
          %s128 = int_to_ptr.vmem [resolvable:$true] %s127
          %133 = dma.hbm_to_vmem [thread:$0]  %s126, 1024, %s128, %s117, 64, 64, 4
        $region20: #{tpu_custom_call.1} parent=15 // pred_fallthru
          _
        // Predicated region
        $region21: #{tpu_custom_call.1} parent=15 // pred_check
          %p134 = pneg %p62
        $region22: #{tpu_custom_call.1} parent=15 // pred_check_branch
          %136 = sbr.rel (%p134) target = $region24
        $region23: #{tpu_custom_call.1} parent=15 // pred_region
          %p137 = scmp.lt.s32.totalorder %s16, 1
          %s138 = scalar_select %p137, %s16, 1
          %s139 = scalar_lea.vmem %s3, %s138
        $region24: #{tpu_custom_call.1} parent=15 // pred_fallthru
          _
      $region16: #{tpu_custom_call.1} parent=5 // pred_fallthru
        _
      %p140 = scmp.le.s32.totalorder 1, %s16
      %p141 = scmp.lt.s32.totalorder %s16, 3
      %p142 = pnand %p140, %p141
      %p143 = pneg %p142
      // Predicated region
      $region25: #{tpu_custom_call.1} parent=5 // pred_check
        _
      $region26: #{tpu_custom_call.1} parent=5 // pred_check_branch
        %145 = sbr.rel (%p142) target = $region28
      $region27: #{tpu_custom_call.1} parent=5 // pred_region
        %s146 = ssub.s32 %s16, 1
        %s147 = sand.u32 %s29, 1
        %s148 = scalar_lea.sflag [#allocation6], %s147
        %s149 = sand.u32 %s29, 1
        %s150 = smul.addr %s149, 64
        %s151 = scalar_lea.vmem [#allocation5], %s150
        // Predicated region
        $region29: #{tpu_custom_call.1} parent=27 // pred_check
          %p152 = pneg %p42
        $region30: #{tpu_custom_call.1} parent=27 // pred_check_branch
          %154 = sbr.rel (%p152) target = $region32
        $region31: #{tpu_custom_call.1} parent=27 // pred_region
          %155 = dma.done %s148, 1024
        $region32: #{tpu_custom_call.1} parent=27 // pred_fallthru
          _
        %s156 = sand.u32 %s29, 1
        %s157 = scalar_lea.sflag [#allocation6], %s156
        %s158 = sand.u32 %s29, 1
        %s159 = smul.addr %s158, 64
        %s160 = scalar_lea.vmem [#allocation5], %s159
        %p161 = pneg %p42
        %p162 = pneg %p39
        %p163 = scmp.lt.s32.totalorder %s21, 1
        %s164 = scalar_select %p163, %s21, 1
        %s165 = scalar_lea.vmem %s3, %s164
        %p166 = pneg %p68
        %p167 = pneg %p65
        %p168 = pneg %p94
        %p169 = pneg %p91
        %s170 = sand.u32 %s81, 1
        %s171 = scalar_lea.sflag [#allocation7], %s170
        %s172 = sand.u32 %s81, 1
        %s173 = smul.addr %s172, 128
        %s174 = scalar_lea.vmem [#allocation8], %s173
        %p175 = scmp.lt.s32.totalorder %s21, 1
        %s176 = scalar_select %p175, %s21, 1
        %s177 = scalar_lea.vmem %s3, %s176
        %p179 = scmp.eq.s32.totalorder %s21, 0
        // Predicated region
        $region33: #{tpu_custom_call.1} parent=27 // pred_check
          %p180 = pneg %p179
        $region34: #{tpu_custom_call.1} parent=27 // pred_check_branch
          %182 = sbr.rel (%p180) target = $region36
        $region35: #{tpu_custom_call.1} parent=27 // pred_region
          $region37: #{tpu_custom_call.1} parent=35
            #allocation9 [shape = 's32[1]{0}', space=sflag, size = 0x4, scoped, tag = 'scoped memory for tpu_custom_call.1']
            // Predicated region
            $region38: #{tpu_custom_call.1} parent=37 // pred_check
              _
            $region39: #{tpu_custom_call.1} parent=37 // pred_check_branch
              %184 = sbr.rel target = $region41
            $region40: #{tpu_custom_call.1} parent=37 // pred_region
              %185 = sst [smem:[#allocation12]] [#allocation11]
              %186 = sst [smem:[#allocation13]] [#allocation10]
            $region41: #{tpu_custom_call.1} parent=37 // pred_fallthru
              _
            %188 = shalt.err (0)
            %s190 = sshll.u32 [#allocation2], 4
            %s191 = int_to_ptr.vmem [resolvable:$true] %s190
            %193 = dma.hbm_to_vmem [thread:$0]  %s0, 1024, %s191, [#allocation9]
            %s194 = smul.u32 4, 16
            %s195 = smul.u32 %s194, 1
            %s196 = sshll.u32 %s195, 4
            %197 = dma.done [#allocation9], %s196
          $region42: #{tpu_custom_call.1} parent=35
            #allocation14 [shape = 's32[1]{0}', space=sflag, size = 0x4, scoped, tag = 'scoped memory for tpu_custom_call.1']
            // Predicated region
            $region43: #{tpu_custom_call.1} parent=42 // pred_check
              _
            $region44: #{tpu_custom_call.1} parent=42 // pred_check_branch
              %199 = sbr.rel target = $region46
            $region45: #{tpu_custom_call.1} parent=42 // pred_region
              %200 = sst [smem:[#allocation12]] [#allocation16]
              %201 = sst [smem:[#allocation13]] [#allocation15]
            $region46: #{tpu_custom_call.1} parent=42 // pred_fallthru
              _
            %203 = shalt.err (0)
            %s205 = sshll.u32 [#allocation3], 4
            %s206 = int_to_ptr.vmem [resolvable:$true] %s205
            %208 = dma.hbm_to_vmem [thread:$0]  %s1, 1024, %s206, [#allocation14]
            %s209 = smul.u32 4, 16
            %s210 = smul.u32 %s209, 1
            %s211 = sshll.u32 %s210, 4
            %212 = dma.done [#allocation14], %s211
          %v213 = vld [vmem:[#allocation3] sm:$0xff]
          %v214 = vld [vmem:[#allocation3 + $0x8] sm:$0xff]
          %v215 = vld [vmem:[#allocation3 + $0x10] sm:$0xff]
          %v216 = vld [vmem:[#allocation3 + $0x18] sm:$0xff]
          %v217 = vld [vmem:[#allocation3 + $0x20] sm:$0xff]
          %v218 = vld [vmem:[#allocation3 + $0x28] sm:$0xff]
          %v219 = vld [vmem:[#allocation3 + $0x30] sm:$0xff]
          %v220 = vld [vmem:[#allocation3 + $0x38] sm:$0xff]
          %v221 = vunpack.c.l.bf16 %v213
          %v222 = vunpack.c.h.bf16 %v213
          %v223 = vunpack.c.l.bf16 %v214
          %v224 = vunpack.c.h.bf16 %v214
          %v225 = vunpack.c.l.bf16 %v215
          %v226 = vunpack.c.h.bf16 %v215
          %v227 = vunpack.c.l.bf16 %v216
          %v228 = vunpack.c.h.bf16 %v216
          %v229 = vunpack.c.l.bf16 %v217
          %v230 = vunpack.c.h.bf16 %v217
          %v231 = vunpack.c.l.bf16 %v218
          %v232 = vunpack.c.h.bf16 %v218
          %v233 = vunpack.c.l.bf16 %v219
          %v234 = vunpack.c.h.bf16 %v219
          %v235 = vunpack.c.l.bf16 %v220
          %v236 = vunpack.c.h.bf16 %v220
          %237 = vadd.xlane.f32.xlu0 %v221
          %v238 = vpop.xlane.xlu0 %237
          %239 = vadd.xlane.f32.xlu0 %v222
          %v240 = vpop.xlane.xlu0 %239
          %241 = vadd.xlane.f32.xlu0 %v223
          %v242 = vpop.xlane.xlu0 %241
          %243 = vadd.xlane.f32.xlu0 %v224
          %v244 = vpop.xlane.xlu0 %243
          %245 = vadd.xlane.f32.xlu0 %v225
          %v246 = vpop.xlane.xlu0 %245
          %247 = vadd.xlane.f32.xlu0 %v226
          %v248 = vpop.xlane.xlu0 %247
          %249 = vadd.xlane.f32.xlu0 %v227
          %v250 = vpop.xlane.xlu0 %249
          %251 = vadd.xlane.f32.xlu0 %v228
          %v252 = vpop.xlane.xlu0 %251
          %253 = vadd.xlane.f32.xlu0 %v229
          %v254 = vpop.xlane.xlu0 %253
          %255 = vadd.xlane.f32.xlu0 %v230
          %v256 = vpop.xlane.xlu0 %255
          %257 = vadd.xlane.f32.xlu0 %v231
          %v258 = vpop.xlane.xlu0 %257
          %259 = vadd.xlane.f32.xlu0 %v232
          %v260 = vpop.xlane.xlu0 %259
          %261 = vadd.xlane.f32.xlu0 %v233
          %v262 = vpop.xlane.xlu0 %261
          %263 = vadd.xlane.f32.xlu0 %v234
          %v264 = vpop.xlane.xlu0 %263
          %265 = vadd.xlane.f32.xlu0 %v235
          %v266 = vpop.xlane.xlu0 %265
          %267 = vadd.xlane.f32.xlu0 %v236
          %v268 = vpop.xlane.xlu0 %267
          %v269 = vmax.f32 %v238, 1.0
          %v270 = vmax.f32 %v240, 1.0
          %v271 = vmax.f32 %v242, 1.0
          %v272 = vmax.f32 %v244, 1.0
          %v273 = vmax.f32 %v246, 1.0
          %v274 = vmax.f32 %v248, 1.0
          %v275 = vmax.f32 %v250, 1.0
          %v276 = vmax.f32 %v252, 1.0
          %v277 = vmax.f32 %v254, 1.0
          %v278 = vmax.f32 %v256, 1.0
          %v279 = vmax.f32 %v258, 1.0
          %v280 = vmax.f32 %v260, 1.0
          %v281 = vmax.f32 %v262, 1.0
          %v282 = vmax.f32 %v264, 1.0
          %v283 = vmax.f32 %v266, 1.0
          %v284 = vmax.f32 %v268, 1.0
          %v285 = vrsqrt.pop %v269
          %v286 = vrsqrt.pop %v270
          %v287 = vrsqrt.pop %v271
          %v288 = vrsqrt.pop %v272
          %v289 = vrsqrt.pop %v273
          %v290 = vrsqrt.pop %v274
          %v291 = vrsqrt.pop %v275
          %v292 = vrsqrt.pop %v276
          %v293 = vrsqrt.pop %v277
          %v294 = vrsqrt.pop %v278
          %v295 = vrsqrt.pop %v279
          %v296 = vrsqrt.pop %v280
          %v297 = vrsqrt.pop %v281
          %v298 = vrsqrt.pop %v282
          %v299 = vrsqrt.pop %v283
          %v300 = vrsqrt.pop %v284
          %vm301 = vcmask 7168
          %302 = vst.msk [vmem:[#allocation4] sm:$0xff] %vm301, %v285
          %303 = vst.msk [vmem:[#allocation4 + $0x8] sm:$0xff] %vm301, %v286
          %304 = vst.msk [vmem:[#allocation4 + $0x10] sm:$0xff] %vm301, %v287
          %305 = vst.msk [vmem:[#allocation4 + $0x18] sm:$0xff] %vm301, %v288
          %306 = vst.msk [vmem:[#allocation4 + $0x20] sm:$0xff] %vm301, %v289
          %307 = vst.msk [vmem:[#allocation4 + $0x28] sm:$0xff] %vm301, %v290
          %308 = vst.msk [vmem:[#allocation4 + $0x30] sm:$0xff] %vm301, %v291
          %309 = vst.msk [vmem:[#allocation4 + $0x38] sm:$0xff] %vm301, %v292
          %310 = vst.msk [vmem:[#allocation4 + $0x40] sm:$0xff] %vm301, %v293
          %311 = vst.msk [vmem:[#allocation4 + $0x48] sm:$0xff] %vm301, %v294
          %312 = vst.msk [vmem:[#allocation4 + $0x50] sm:$0xff] %vm301, %v295
          %313 = vst.msk [vmem:[#allocation4 + $0x58] sm:$0xff] %vm301, %v296
          %314 = vst.msk [vmem:[#allocation4 + $0x60] sm:$0xff] %vm301, %v297
          %315 = vst.msk [vmem:[#allocation4 + $0x68] sm:$0xff] %vm301, %v298
          %316 = vst.msk [vmem:[#allocation4 + $0x70] sm:$0xff] %vm301, %v299
          %317 = vst.msk [vmem:[#allocation4 + $0x78] sm:$0xff] %vm301, %v300
        $region36: #{tpu_custom_call.1} parent=27 // pred_fallthru
          _
        %v318 = vld [vmem:[#allocation4] sm:$0xff]
        %v319 = vld [vmem:[#allocation4 + $0x8] sm:$0xff]
        %v320 = vld [vmem:[#allocation4 + $0x10] sm:$0xff]
        %v321 = vld [vmem:[#allocation4 + $0x18] sm:$0xff]
        %v322 = vld [vmem:[#allocation4 + $0x20] sm:$0xff]
        %v323 = vld [vmem:[#allocation4 + $0x28] sm:$0xff]
        %v324 = vld [vmem:[#allocation4 + $0x30] sm:$0xff]
        %v325 = vld [vmem:[#allocation4 + $0x38] sm:$0xff]
        %v326 = vld [vmem:[#allocation4 + $0x40] sm:$0xff]
        %v327 = vld [vmem:[#allocation4 + $0x48] sm:$0xff]
        %v328 = vld [vmem:[#allocation4 + $0x50] sm:$0xff]
        %v329 = vld [vmem:[#allocation4 + $0x58] sm:$0xff]
        %v330 = vld [vmem:[#allocation4 + $0x60] sm:$0xff]
        %v331 = vld [vmem:[#allocation4 + $0x68] sm:$0xff]
        %v332 = vld [vmem:[#allocation4 + $0x70] sm:$0xff]
        %v333 = vld [vmem:[#allocation4 + $0x78] sm:$0xff]
        %v334 = vld [vmem:[#allocation2] sm:$0xff]
        %v335 = vld [vmem:[#allocation2 + $0x8] sm:$0xff]
        %v336 = vld [vmem:[#allocation2 + $0x10] sm:$0xff]
        %v337 = vld [vmem:[#allocation2 + $0x18] sm:$0xff]
        %v338 = vld [vmem:[#allocation2 + $0x20] sm:$0xff]
        %v339 = vld [vmem:[#allocation2 + $0x28] sm:$0xff]
        %v340 = vld [vmem:[#allocation2 + $0x30] sm:$0xff]
        %v341 = vld [vmem:[#allocation2 + $0x38] sm:$0xff]
        %v342 = vld [vmem:[%s151] sm:$0xf]
        %v343 = vld [vmem:[%s151 + $0x4] sm:$0xf]
        %v344 = vld [vmem:[%s151 + $0x8] sm:$0xf]
        %v345 = vld [vmem:[%s151 + $0xc] sm:$0xf]
        %v346 = vld [vmem:[%s151 + $0x10] sm:$0xf]
        %v347 = vld [vmem:[%s151 + $0x14] sm:$0xf]
        %v348 = vld [vmem:[%s151 + $0x18] sm:$0xf]
        %v349 = vld [vmem:[%s151 + $0x1c] sm:$0xf]
        %v350 = vld [vmem:[%s151 + $0x20] sm:$0xf]
        %v351 = vld [vmem:[%s151 + $0x24] sm:$0xf]
        %v352 = vld [vmem:[%s151 + $0x28] sm:$0xf]
        %v353 = vld [vmem:[%s151 + $0x2c] sm:$0xf]
        %v354 = vld [vmem:[%s151 + $0x30] sm:$0xf]
        %v355 = vld [vmem:[%s151 + $0x34] sm:$0xf]
        %v356 = vld [vmem:[%s151 + $0x38] sm:$0xf]
        %v357 = vld [vmem:[%s151 + $0x3c] sm:$0xf]
        %v374 = vunpack.c.l.b16 %v342
        %v375 = vunpack.c.l.b16 %v343
        %v376 = vunpack.c.l.b16 %v344
        %v377 = vunpack.c.l.b16 %v345
        %v378 = vunpack.c.l.b16 %v346
        %v379 = vunpack.c.l.b16 %v347
        %v380 = vunpack.c.l.b16 %v348
        %v381 = vunpack.c.l.b16 %v349
        %v382 = vunpack.c.l.b16 %v350
        %v383 = vunpack.c.l.b16 %v351
        %v384 = vunpack.c.l.b16 %v352
        %v385 = vunpack.c.l.b16 %v353
        %v386 = vunpack.c.l.b16 %v354
        %v387 = vunpack.c.l.b16 %v355
        %v388 = vunpack.c.l.b16 %v356
        %v389 = vunpack.c.l.b16 %v357
        %v390 = vpack.c.b16 %v375, %v374
        %v391 = vpack.c.b16 %v377, %v376
        %v392 = vpack.c.b16 %v379, %v378
        %v393 = vpack.c.b16 %v381, %v380
        %v394 = vpack.c.b16 %v383, %v382
        %v395 = vpack.c.b16 %v385, %v384
        %v396 = vpack.c.b16 %v387, %v386
        %v397 = vpack.c.b16 %v389, %v388
        %406 = vmatprep.subr.bf16.mxu0 0
        %407 = vmatpush1.bf16.msra.mxu0 %v390
        %408 = vmatprep.subr.bf16.mxu0 0
        %409 = vmatpush1.bf16.msra.mxu0 %v391
        %410 = vmatprep.subr.bf16.mxu0 0
        %411 = vmatpush1.bf16.msra.mxu0 %v392
        %412 = vmatprep.subr.bf16.mxu0 0
        %413 = vmatpush1.bf16.msra.mxu0 %v393
        %414 = vmatprep.subr.bf16.mxu0 0
        %415 = vmatpush1.bf16.msra.mxu0 %v394
        %416 = vmatprep.subr.bf16.mxu0 0
        %417 = vmatpush1.bf16.msra.mxu0 %v395
        %418 = vmatprep.subr.bf16.mxu0 0
        %419 = vmatpush1.bf16.msra.mxu0 %v396
        %420 = vmatprep.subr.bf16.mxu0 0
        %421 = vmatpush1.bf16.msra.mxu0 %v397
        %422 = vmatprep.subr.bf16.mxu0 0
        %423 = vmatpush1.bf16.msra.mxu0 0
        %424 = vmatprep.subr.bf16.mxu0 0
        %425 = vmatpush1.bf16.msra.mxu0 0
        %426 = vmatprep.subr.bf16.mxu0 0
        %427 = vmatpush1.bf16.msra.mxu0 0
        %428 = vmatprep.subr.bf16.mxu0 0
        %429 = vmatpush1.bf16.msra.mxu0 0
        %430 = vmatprep.subr.bf16.mxu0 0
        %431 = vmatpush1.bf16.msra.mxu0 0
        %432 = vmatprep.subr.bf16.mxu0 0
        %433 = vmatpush1.bf16.msra.mxu0 0
        %434 = vmatprep.subr.bf16.mxu0 0
        %435 = vmatpush1.bf16.msra.mxu0 0
        %436 = vmatprep.subr.bf16.mxu0 0
        %437 = vmatpush1.bf16.msra.mxu0 0
        %438 = vmatprep.mubr.bf16.mxu0 0
        %439 = vmatmul.mubr.bf16.gmra.mrb[0].mxu0 %v334
        %v440 = vpop.f32.mrb[0].mxu0
        %v441 = vadd.f32 0.0, %v440
        %v442 = vpop.f32.mrb[0].mxu0
        %v443 = vpop.f32.mrb[0].mxu0
        %v444 = vadd.f32 0.0, %v443
        %v445 = vpop.f32.mrb[0].mxu0
        %446 = vmatprep.mubr.bf16.mxu0 0
        %447 = vmatmul.mubr.bf16.gmra.mrb[0].mxu0 %v335
        %v448 = vpop.f32.mrb[0].mxu0
        %v449 = vadd.f32 0.0, %v448
        %v450 = vpop.f32.mrb[0].mxu0
        %v451 = vpop.f32.mrb[0].mxu0
        %v452 = vadd.f32 0.0, %v451
        %v453 = vpop.f32.mrb[0].mxu0
        %454 = vmatprep.mubr.bf16.mxu0 0
        %455 = vmatmul.mubr.bf16.gmra.mrb[0].mxu0 %v336
        %v456 = vpop.f32.mrb[0].mxu0
        %v457 = vadd.f32 0.0, %v456
        %v458 = vpop.f32.mrb[0].mxu0
        %v459 = vpop.f32.mrb[0].mxu0
        %v460 = vadd.f32 0.0, %v459
        %v461 = vpop.f32.mrb[0].mxu0
        %462 = vmatprep.mubr.bf16.mxu0 0
        %463 = vmatmul.mubr.bf16.gmra.mrb[0].mxu0 %v337
        %v464 = vpop.f32.mrb[0].mxu0
        %v465 = vadd.f32 0.0, %v464
        %v466 = vpop.f32.mrb[0].mxu0
        %v467 = vpop.f32.mrb[0].mxu0
        %v468 = vadd.f32 0.0, %v467
        %v469 = vpop.f32.mrb[0].mxu0
        %470 = vmatprep.mubr.bf16.mxu0 0
        %471 = vmatmul.mubr.bf16.gmra.mrb[0].mxu0 %v338
        %v472 = vpop.f32.mrb[0].mxu0
        %v473 = vadd.f32 0.0, %v472
        %v474 = vpop.f32.mrb[0].mxu0
        %v475 = vpop.f32.mrb[0].mxu0
        %v476 = vadd.f32 0.0, %v475
        %v477 = vpop.f32.mrb[0].mxu0
        %478 = vmatprep.mubr.bf16.mxu0 0
        %479 = vmatmul.mubr.bf16.gmra.mrb[0].mxu0 %v339
        %v480 = vpop.f32.mrb[0].mxu0
        %v481 = vadd.f32 0.0, %v480
        %v482 = vpop.f32.mrb[0].mxu0
        %v483 = vpop.f32.mrb[0].mxu0
        %v484 = vadd.f32 0.0, %v483
        %v485 = vpop.f32.mrb[0].mxu0
        %486 = vmatprep.mubr.bf16.mxu0 0
        %487 = vmatmul.mubr.bf16.gmra.mrb[0].mxu0 %v340
        %v488 = vpop.f32.mrb[0].mxu0
        %v489 = vadd.f32 0.0, %v488
        %v490 = vpop.f32.mrb[0].mxu0
        %v491 = vpop.f32.mrb[0].mxu0
        %v492 = vadd.f32 0.0, %v491
        %v493 = vpop.f32.mrb[0].mxu0
        %494 = vmatprep.mubr.bf16.mxu0 0
        %495 = vmatmul.mubr.bf16.gmra.mrb[0].mxu0 %v341
        %v496 = vpop.f32.mrb[0].mxu0
        %v497 = vadd.f32 0.0, %v496
        %v498 = vpop.f32.mrb[0].mxu0
        %v499 = vpop.f32.mrb[0].mxu0
        %v500 = vadd.f32 0.0, %v499
        %v501 = vpop.f32.mrb[0].mxu0
        %502 = vdwg.mxu0
        %v503 = vld [vmem:[#allocation3] sm:$0xff]
        %v504 = vld [vmem:[#allocation3 + $0x8] sm:$0xff]
        %v505 = vld [vmem:[#allocation3 + $0x10] sm:$0xff]
        %v506 = vld [vmem:[#allocation3 + $0x18] sm:$0xff]
        %v507 = vld [vmem:[#allocation3 + $0x20] sm:$0xff]
        %v508 = vld [vmem:[#allocation3 + $0x28] sm:$0xff]
        %v509 = vld [vmem:[#allocation3 + $0x30] sm:$0xff]
        %v510 = vld [vmem:[#allocation3 + $0x38] sm:$0xff]
        %512 = vset.pattern.permute.xlu0 0
        %513 = vperm.xlu0 %512, %v318
        %v514 = vpop.permute.xlu0 %513
        %517 = vset.pattern.permute.xlu0 0
        %518 = vperm.xlu0 %517, %v319
        %v519 = vpop.permute.xlu0 %518
        %522 = vset.pattern.permute.xlu0 0
        %523 = vperm.xlu0 %522, %v320
        %v524 = vpop.permute.xlu0 %523
        %527 = vset.pattern.permute.xlu0 0
        %528 = vperm.xlu0 %527, %v321
        %v529 = vpop.permute.xlu0 %528
        %532 = vset.pattern.permute.xlu0 0
        %533 = vperm.xlu0 %532, %v322
        %v534 = vpop.permute.xlu0 %533
        %537 = vset.pattern.permute.xlu0 0
        %538 = vperm.xlu0 %537, %v323
        %v539 = vpop.permute.xlu0 %538
        %542 = vset.pattern.permute.xlu0 0
        %543 = vperm.xlu0 %542, %v324
        %v544 = vpop.permute.xlu0 %543
        %547 = vset.pattern.permute.xlu0 0
        %548 = vperm.xlu0 %547, %v325
        %v549 = vpop.permute.xlu0 %548
        %552 = vset.pattern.permute.xlu0 0
        %553 = vperm.xlu0 %552, %v326
        %v554 = vpop.permute.xlu0 %553
        %557 = vset.pattern.permute.xlu0 0
        %558 = vperm.xlu0 %557, %v327
        %v559 = vpop.permute.xlu0 %558
        %562 = vset.pattern.permute.xlu0 0
        %563 = vperm.xlu0 %562, %v328
        %v564 = vpop.permute.xlu0 %563
        %567 = vset.pattern.permute.xlu0 0
        %568 = vperm.xlu0 %567, %v329
        %v569 = vpop.permute.xlu0 %568
        %572 = vset.pattern.permute.xlu0 0
        %573 = vperm.xlu0 %572, %v330
        %v574 = vpop.permute.xlu0 %573
        %577 = vset.pattern.permute.xlu0 0
        %578 = vperm.xlu0 %577, %v331
        %v579 = vpop.permute.xlu0 %578
        %582 = vset.pattern.permute.xlu0 0
        %583 = vperm.xlu0 %582, %v332
        %v584 = vpop.permute.xlu0 %583
        %587 = vset.pattern.permute.xlu0 0
        %588 = vperm.xlu0 %587, %v333
        %v589 = vpop.permute.xlu0 %588
        %v591 = vmul.f32 %v514, %v441
        %v592 = vmul.f32 %v519, %v444
        %v593 = vmul.f32 %v524, %v449
        %v594 = vmul.f32 %v529, %v452
        %v595 = vmul.f32 %v534, %v457
        %v596 = vmul.f32 %v539, %v460
        %v597 = vmul.f32 %v544, %v465
        %v598 = vmul.f32 %v549, %v468
        %v599 = vmul.f32 %v554, %v473
        %v600 = vmul.f32 %v559, %v476
        %v601 = vmul.f32 %v564, %v481
        %v602 = vmul.f32 %v569, %v484
        %v603 = vmul.f32 %v574, %v489
        %v604 = vmul.f32 %v579, %v492
        %v605 = vmul.f32 %v584, %v497
        %v606 = vmul.f32 %v589, %v500
        %v607 = vpack.c.bf16 %v592, %v591
        %v608 = vpack.c.bf16 %v594, %v593
        %v609 = vpack.c.bf16 %v596, %v595
        %v610 = vpack.c.bf16 %v598, %v597
        %v611 = vpack.c.bf16 %v600, %v599
        %v612 = vpack.c.bf16 %v602, %v601
        %v613 = vpack.c.bf16 %v604, %v603
        %v614 = vpack.c.bf16 %v606, %v605
        %615 = vmatprep.subr.bf16.mxu0 0
        %616 = vmatpush1.bf16.msra.mxu0 %v607
        %617 = vmatprep.subr.bf16.mxu0 0
        %618 = vmatpush1.bf16.msra.mxu0 %v608
        %619 = vmatprep.subr.bf16.mxu0 0
        %620 = vmatpush1.bf16.msra.mxu0 %v609
        %621 = vmatprep.subr.bf16.mxu0 0
        %622 = vmatpush1.bf16.msra.mxu0 %v610
        %623 = vmatprep.subr.bf16.mxu0 0
        %624 = vmatpush1.bf16.msra.mxu0 %v611
        %625 = vmatprep.subr.bf16.mxu0 0
        %626 = vmatpush1.bf16.msra.mxu0 %v612
        %627 = vmatprep.subr.bf16.mxu0 0
        %628 = vmatpush1.bf16.msra.mxu0 %v613
        %629 = vmatprep.subr.bf16.mxu0 0
        %630 = vmatpush1.bf16.msra.mxu0 %v614
        %631 = vmatprep.subr.bf16.mxu0 0
        %632 = vmatpush1.bf16.msra.mxu0 0
        %633 = vmatprep.subr.bf16.mxu0 0
        %634 = vmatpush1.bf16.msra.mxu0 0
        %635 = vmatprep.subr.bf16.mxu0 0
        %636 = vmatpush1.bf16.msra.mxu0 0
        %637 = vmatprep.subr.bf16.mxu0 0
        %638 = vmatpush1.bf16.msra.mxu0 0
        %639 = vmatprep.subr.bf16.mxu0 0
        %640 = vmatpush1.bf16.msra.mxu0 0
        %641 = vmatprep.subr.bf16.mxu0 0
        %642 = vmatpush1.bf16.msra.mxu0 0
        %643 = vmatprep.subr.bf16.mxu0 0
        %644 = vmatpush1.bf16.msra.mxu0 0
        %645 = vmatprep.subr.bf16.mxu0 0
        %646 = vmatpush1.bf16.msra.mxu0 0
        %647 = vmatprep.mubr.bf16.mxu0 0
        %648 = vmatmul.mubr.bf16.gmra.mrb[0].mxu0 %v503
        %v649 = vpop.f32.mrb[0].mxu0
        %v650 = vadd.f32 0.0, %v649
        %v651 = vpop.f32.mrb[0].mxu0
        %v652 = vpop.f32.mrb[0].mxu0
        %v653 = vadd.f32 0.0, %v652
        %v654 = vpop.f32.mrb[0].mxu0
        %655 = vmatprep.mubr.bf16.mxu0 0
        %656 = vmatmul.mubr.bf16.gmra.mrb[0].mxu0 %v504
        %v657 = vpop.f32.mrb[0].mxu0
        %v658 = vadd.f32 0.0, %v657
        %v659 = vpop.f32.mrb[0].mxu0
        %v660 = vpop.f32.mrb[0].mxu0
        %v661 = vadd.f32 0.0, %v660
        %v662 = vpop.f32.mrb[0].mxu0
        %663 = vmatprep.mubr.bf16.mxu0 0
        %664 = vmatmul.mubr.bf16.gmra.mrb[0].mxu0 %v505
        %v665 = vpop.f32.mrb[0].mxu0
        %v666 = vadd.f32 0.0, %v665
        %v667 = vpop.f32.mrb[0].mxu0
        %v668 = vpop.f32.mrb[0].mxu0
        %v669 = vadd.f32 0.0, %v668
        %v670 = vpop.f32.mrb[0].mxu0
        %671 = vmatprep.mubr.bf16.mxu0 0
        %672 = vmatmul.mubr.bf16.gmra.mrb[0].mxu0 %v506
        %v673 = vpop.f32.mrb[0].mxu0
        %v674 = vadd.f32 0.0, %v673
        %v675 = vpop.f32.mrb[0].mxu0
        %v676 = vpop.f32.mrb[0].mxu0
        %v677 = vadd.f32 0.0, %v676
        %v678 = vpop.f32.mrb[0].mxu0
        %679 = vmatprep.mubr.bf16.mxu0 0
        %680 = vmatmul.mubr.bf16.gmra.mrb[0].mxu0 %v507
        %v681 = vpop.f32.mrb[0].mxu0
        %v682 = vadd.f32 0.0, %v681
        %v683 = vpop.f32.mrb[0].mxu0
        %v684 = vpop.f32.mrb[0].mxu0
        %v685 = vadd.f32 0.0, %v684
        %v686 = vpop.f32.mrb[0].mxu0
        %687 = vmatprep.mubr.bf16.mxu0 0
        %688 = vmatmul.mubr.bf16.gmra.mrb[0].mxu0 %v508
        %v689 = vpop.f32.mrb[0].mxu0
        %v690 = vadd.f32 0.0, %v689
        %v691 = vpop.f32.mrb[0].mxu0
        %v692 = vpop.f32.mrb[0].mxu0
        %v693 = vadd.f32 0.0, %v692
        %v694 = vpop.f32.mrb[0].mxu0
        %695 = vmatprep.mubr.bf16.mxu0 0
        %696 = vmatmul.mubr.bf16.gmra.mrb[0].mxu0 %v509
        %v697 = vpop.f32.mrb[0].mxu0
        %v698 = vadd.f32 0.0, %v697
        %v699 = vpop.f32.mrb[0].mxu0
        %v700 = vpop.f32.mrb[0].mxu0
        %v701 = vadd.f32 0.0, %v700
        %v702 = vpop.f32.mrb[0].mxu0
        %703 = vmatprep.mubr.bf16.mxu0 0
        %704 = vmatmul.mubr.bf16.gmra.mrb[0].mxu0 %v510
        %v705 = vpop.f32.mrb[0].mxu0
        %v706 = vadd.f32 0.0, %v705
        %v707 = vpop.f32.mrb[0].mxu0
        %v708 = vpop.f32.mrb[0].mxu0
        %v709 = vadd.f32 0.0, %v708
        %v710 = vpop.f32.mrb[0].mxu0
        %711 = vdwg.mxu0
        %v712 = vmul.f32 %v514, %v650
        %v713 = vmul.f32 %v519, %v653
        %v714 = vmul.f32 %v524, %v658
        %v715 = vmul.f32 %v529, %v661
        %v716 = vmul.f32 %v534, %v666
        %v717 = vmul.f32 %v539, %v669
        %v718 = vmul.f32 %v544, %v674
        %v719 = vmul.f32 %v549, %v677
        %v720 = vmul.f32 %v554, %v682
        %v721 = vmul.f32 %v559, %v685
        %v722 = vmul.f32 %v564, %v690
        %v723 = vmul.f32 %v569, %v693
        %v724 = vmul.f32 %v574, %v698
        %v725 = vmul.f32 %v579, %v701
        %v726 = vmul.f32 %v584, %v706
        %v727 = vmul.f32 %v589, %v709
        %v728 = vld [vmem:[%s177] sm:$0x1]
        %v730 = vlaneseq
        %v731 = vshrl.u32 %v730, 7
        %v732 = vsub.s32 0, %v731
        %v733 = vrot.slane %v728, %v732
        %v735 = vadd.f32 %v712, %v733
        %v736 = vadd.f32 %v713, %v733
        %v737 = vadd.f32 %v714, %v733
        %v738 = vadd.f32 %v715, %v733
        %v739 = vadd.f32 %v716, %v733
        %v740 = vadd.f32 %v717, %v733
        %v741 = vadd.f32 %v718, %v733
        %v742 = vadd.f32 %v719, %v733
        %v743 = vadd.f32 %v720, %v733
        %v744 = vadd.f32 %v721, %v733
        %v745 = vadd.f32 %v722, %v733
        %v746 = vadd.f32 %v723, %v733
        %v747 = vadd.f32 %v724, %v733
        %v748 = vadd.f32 %v725, %v733
        %v749 = vadd.f32 %v726, %v733
        %v750 = vadd.f32 %v727, %v733
        %v751 = vmax.f32 %v735, 0.0
        %v752 = vmax.f32 %v736, 0.0
        %v753 = vmax.f32 %v737, 0.0
        %v754 = vmax.f32 %v738, 0.0
        %v755 = vmax.f32 %v739, 0.0
        %v756 = vmax.f32 %v740, 0.0
        %v757 = vmax.f32 %v741, 0.0
        %v758 = vmax.f32 %v742, 0.0
        %v759 = vmax.f32 %v743, 0.0
        %v760 = vmax.f32 %v744, 0.0
        %v761 = vmax.f32 %v745, 0.0
        %v762 = vmax.f32 %v746, 0.0
        %v763 = vmax.f32 %v747, 0.0
        %v764 = vmax.f32 %v748, 0.0
        %v765 = vmax.f32 %v749, 0.0
        %v766 = vmax.f32 %v750, 0.0
        %v767 = vpack.c.bf16 %v752, %v751
        %v768 = vpack.c.bf16 %v754, %v753
        %v769 = vpack.c.bf16 %v756, %v755
        %v770 = vpack.c.bf16 %v758, %v757
        %v771 = vpack.c.bf16 %v760, %v759
        %v772 = vpack.c.bf16 %v762, %v761
        %v773 = vpack.c.bf16 %v764, %v763
        %v774 = vpack.c.bf16 %v766, %v765
        %775 = vst [vmem:[#allocation2] sm:$0xff] %v767
        %776 = vst [vmem:[#allocation2 + $0x8] sm:$0xff] %v768
        %777 = vst [vmem:[#allocation2 + $0x10] sm:$0xff] %v769
        %778 = vst [vmem:[#allocation2 + $0x18] sm:$0xff] %v770
        %779 = vst [vmem:[#allocation2 + $0x20] sm:$0xff] %v771
        %780 = vst [vmem:[#allocation2 + $0x28] sm:$0xff] %v772
        %781 = vst [vmem:[#allocation2 + $0x30] sm:$0xff] %v773
        %782 = vst [vmem:[#allocation2 + $0x38] sm:$0xff] %v774
        %783 = vst [vmem:[%s174] sm:$0xff] %v751
        %784 = vst [vmem:[%s174 + $0x8] sm:$0xff] %v752
        %785 = vst [vmem:[%s174 + $0x10] sm:$0xff] %v753
        %786 = vst [vmem:[%s174 + $0x18] sm:$0xff] %v754
        %787 = vst [vmem:[%s174 + $0x20] sm:$0xff] %v755
        %788 = vst [vmem:[%s174 + $0x28] sm:$0xff] %v756
        %789 = vst [vmem:[%s174 + $0x30] sm:$0xff] %v757
        %790 = vst [vmem:[%s174 + $0x38] sm:$0xff] %v758
        %791 = vst [vmem:[%s174 + $0x40] sm:$0xff] %v759
        %792 = vst [vmem:[%s174 + $0x48] sm:$0xff] %v760
        %793 = vst [vmem:[%s174 + $0x50] sm:$0xff] %v761
        %794 = vst [vmem:[%s174 + $0x58] sm:$0xff] %v762
        %795 = vst [vmem:[%s174 + $0x60] sm:$0xff] %v763
        %796 = vst [vmem:[%s174 + $0x68] sm:$0xff] %v764
        %797 = vst [vmem:[%s174 + $0x70] sm:$0xff] %v765
        %798 = vst [vmem:[%s174 + $0x78] sm:$0xff] %v766
        %s799 = sand.u32 %s81, 1
        %s800 = scalar_lea.sflag [#allocation7], %s799
        %s801 = sand.u32 %s81, 1
        %s802 = smul.addr %s801, 128
        %s803 = scalar_lea.vmem [#allocation8], %s802
        // Predicated region
        $region47: #{tpu_custom_call.1} parent=27 // pred_check
          %p804 = pneg %p91
        $region48: #{tpu_custom_call.1} parent=27 // pred_check_branch
          %806 = sbr.rel (%p804) target = $region50
        $region49: #{tpu_custom_call.1} parent=27 // pred_region
          %s808 = ssub.s32 2048, 2048
          %809 = vsyncadd %s800, %s808
          %s810 = smul.addr %s21, 16
          %s811 = smul.addr %s810, 128
          %s812 = scalar_lea.hbm %s4, %s811
          %s813 = sshll.u32 %s803, 4
          %s814 = int_to_ptr.vmem [resolvable:$true] %s813
          %819 = dma.vmem_to_hbm [thread:$0]  %s814, 2048, %s812, %s800, 128, 128, 8
        $region50: #{tpu_custom_call.1} parent=27 // pred_fallthru
          _
      $region28: #{tpu_custom_call.1} parent=5 // pred_fallthru
        _
      %p820 = scmp.le.s32.totalorder 2, %s16
      // Predicated region
      $region51: #{tpu_custom_call.1} parent=5 // pred_check
        %p821 = pneg %p820
      $region52: #{tpu_custom_call.1} parent=5 // pred_check_branch
        %823 = sbr.rel (%p821) target = $region54
      $region53: #{tpu_custom_call.1} parent=5 // pred_region
        %s824 = ssub.s32 %s16, 2
        // Predicated region
        $region55: #{tpu_custom_call.1} parent=53 // pred_check
          %p825 = pneg %p97
        $region56: #{tpu_custom_call.1} parent=53 // pred_check_branch
          %827 = sbr.rel (%p825) target = $region58
        $region57: #{tpu_custom_call.1} parent=53 // pred_region
          %s828 = sand.u32 %s82, 1
          %s829 = scalar_lea.sflag [#allocation7], %s828
          %s830 = sand.u32 %s82, 1
          %s831 = smul.addr %s830, 128
          %s832 = scalar_lea.vmem [#allocation8], %s831
          %833 = dma.done %s829, 2048
        $region58: #{tpu_custom_call.1} parent=53 // pred_fallthru
          _
      $region54: #{tpu_custom_call.1} parent=5 // pred_fallthru
        _
    $region6: #{tpu_custom_call.1} parent=1 // loop_footer
      %s20 = sadd.s32 1, %s16
    $region7: #{tpu_custom_call.1} parent=1 // loop_footer_branch
      %15 = sbr.rel target = $region3
    $region8: #{tpu_custom_call.1} parent=1 // loop_exit
      _
    %834 = vsyncpa [#allocation6], 1
    %s835 = scalar_lea.sflag [#allocation6], 1
    %836 = vsyncpa %s835, 1
    %837 = vsyncpa [#allocation7], 1
    %s838 = scalar_lea.sflag [#allocation7], 1
    %839 = vsyncpa %s838, 1

</llo_original>
